<compile_context>
chip_gen: v7x
topology: tpu7x:2x2x1
jax: 0.10.0
libtpu: 0.0.40
codegen_flags: <defaults>
</compile_context>

<pallas_src>
import jax
import jax.numpy as jnp
from jax.experimental import pallas as pl
from jax.experimental.pallas import tpu as pltpu


def ode_kernel(t_ref, Ta_ref, St_ref, hs_ref, O_ref, c_ref, y_ref, dy_ref):
    """Scalar-prefetch refs (SMEM):
         t_ref  f32[1]           current time
         Ta_ref/St_ref/hs_ref/O_ref  f32[L]  exogenous tables
         c_ref  f32[6]           [a_a, a_s, a_h, a_v, a_o, heater_max]
       VMEM refs:
         y_ref / dy_ref  (2, row_tile, 128); row 0 = T, row 1 = H.
    """
    L = Ta_ref.shape[0]

    # idx = min(int(t), L - 1)   (int() truncates toward zero; matches for t >= 0)
    idx = jnp.minimum(t_ref[0].astype(jnp.int32), L - 1)

    a_a = c_ref[0]
    a_s = c_ref[1]
    a_h = c_ref[2]
    a_v = c_ref[3]
    a_o = c_ref[4]
    heater_max = c_ref[5]

    Ta = Ta_ref[idx]
    St = St_ref[idx]
    hs = hs_ref[idx]
    Oi = O_ref[idx]

    # Fold the scalar algebra on the scalar unit (free in-bundle):
    c1 = a_a + a_v
    c0 = Ta * c1 + St * a_s + Oi * a_o
    hs20 = 20.0 * hs
    hm02 = 0.02 * heater_max

    T = y_ref[0]            # (row_tile, 128) dense slab
    H = y_ref[1]            # (row_tile, 128) dense slab

    # charging = sigmoid((h_s[idx] - T) * 20) == sigmoid(hs20 - 20*T)
    charging = jax.nn.sigmoid(hs20 - 20.0 * T)

    # dT = (T_a-T)*a_a + S_t*a_s + H*a_h + (T_a-T)*a_v + O*a_o = c0 - c1*T + a_h*H
    dy_ref[0] = c0 - c1 * T + a_h * H

    # dH = 0.02*(heater_max - H)*charging - 0.02*H*(1-charging) = hm02*charging - 0.02*H
    dy_ref[1] = hm02 * charging - 0.02 * H


def _pick_row_tile(rows, max_rows_per_block):
    """Largest divisor of `rows` that is a multiple of 8, <= max_rows_per_block,
    and (when rows >= 16) yields >= 2 blocks so v7x's two TensorCores both get
    work.  Falls back to one full block (block dims == array dims is always a
    legal layout)."""
    target = max_rows_per_block if rows < 16 else min(max_rows_per_block, rows // 2)
    best = 0
    d = 1
    while d * d <= rows:
        if rows % d == 0:
            for cand in (d, rows // d):
                if cand <= target and cand % 8 == 0 and cand > best:
                    best = cand
        d += 1
    return best if best > 0 else rows


def temperature_ode_forward(t, y, T_a, S_t, h_s, O, constants, heater_max,
                            *, max_rows_per_block=2048):
    """Pallas equivalent of TemperatureODE.forward.

    t: scalar; y: (2, N) float32 with N % 128 == 0.
    Returns (2, N) float32 = stack([dT, dH]).
    """
    y = jnp.asarray(y, jnp.float32)
    two, N = y.shape
    assert two == 2 and N % 128 == 0, "state must be (2, N) with N % 128 == 0"

    rows = N // 128
    row_tile = _pick_row_tile(rows, max_rows_per_block)
    num_blocks = rows // row_tile

    # Scalar-prefetch operands (land in SMEM; all folding happens in-kernel).
    t_arr = jnp.asarray(t, jnp.float32).reshape(1)
    Ta = jnp.asarray(T_a, jnp.float32)
    St = jnp.asarray(S_t, jnp.float32)
    hs = jnp.asarray(h_s, jnp.float32)
    Oa = jnp.asarray(O, jnp.float32)
    a_a, a_s, a_h, a_v, a_o = constants
    consts = jnp.asarray([a_a, a_s, a_h, a_v, a_o, heater_max], jnp.float32)

    y3 = y.reshape(2, rows, 128)                       # lane/sublane-dense slabs

    out = pl.pallas_call(
        ode_kernel,
        out_shape=jax.ShapeDtypeStruct((2, rows, 128), jnp.float32),
        grid_spec=pltpu.PrefetchScalarGridSpec(
            num_scalar_prefetch=6,
            grid=(num_blocks,),
            in_specs=[
                pl.BlockSpec((2, row_tile, 128), lambda i, *_: (0, i, 0)),
            ],
            out_specs=pl.BlockSpec((2, row_tile, 128), lambda i, *_: (0, i, 0)),
        ),
        compiler_params=pltpu.CompilerParams(
            dimension_semantics=(
                ("parallel",) if num_blocks > 1 else ("arbitrary",))),
        cost_estimate=pl.CostEstimate(
            flops=8 * N, transcendentals=N, bytes_accessed=16 * N),
    )(t_arr, Ta, St, hs, Oa, consts, y3)

    return out.reshape(2, N)


def temperature_ode_ref(t, y, T_a, S_t, h_s, O, constants, heater_max):
    """Pure-JAX reference mirroring the PyTorch forward exactly (unfolded)."""
    T, H = y[0], y[1]
    idx = jnp.minimum(jnp.asarray(t).astype(jnp.int32), T_a.shape[0] - 1)
    a_a, a_s, a_h, a_v, a_o = constants
    charging = jax.nn.sigmoid((h_s[idx] - T) * 20.0)
    dH = 0.02 * (heater_max - H) * charging - 0.02 * H * (1.0 - charging)
    dT = ((T_a[idx] - T) * a_a + S_t[idx] * a_s + H * a_h
          + (T_a[idx] - T) * a_v + O[idx] * a_o)
    return jnp.stack([dT, dH])


if __name__ == "__main__":
    key = jax.random.PRNGKey(0)
    kTa, kSt, khs, kO, ky = jax.random.split(key, 5)

    L = 8            # length of the exogenous time series
    t = 3.7

    # Deterministic synthetic "module parameters" (shapes from __init__).
    T_a = 15.0 + 10.0 * jax.random.uniform(kTa, (L,), jnp.float32)   # ambient temp
    S_t = jax.random.uniform(kSt, (L,), jnp.float32)                 # solar
    h_s = 18.0 + 4.0 * jax.random.uniform(khs, (L,), jnp.float32)    # setpoint
    O = jax.random.uniform(kO, (L,), jnp.float32)                    # occupancy
    constants = (0.05, 0.8, 0.3, 0.02, 0.5)                          # a_a,a_s,a_h,a_v,a_o
    heater_max = 1.0

    ok = True
    # N=1024: single dense block (8 sublanes x 128 lanes per row of state).
    # N=4096: 32 sublane rows -> 2 blocks, exercising the multi-block/v7x path.
    for N in (1024, 4096):
        y = jnp.stack([
            15.0 + 10.0 * jax.random.uniform(jax.random.fold_in(ky, N), (N,), jnp.float32),
            jax.random.uniform(jax.random.fold_in(ky, N + 1), (N,), jnp.float32),
        ])
        out = temperature_ode_forward(t, y, T_a, S_t, h_s, O, constants, heater_max)
        out = jax.block_until_ready(out)
        ref = temperature_ode_ref(t, y, T_a, S_t, h_s, O, constants, heater_max)
        ok &= (out.shape == (2, N))
        ok &= bool(jnp.allclose(out, ref, atol=1e-5, rtol=1e-5))

    assert ok, "mismatch vs reference"
    print("KERNEL_OK")
</pallas_src>

<mosaic_0001>
module attributes {stable_mosaic.version = 11 : i64} {
  func.func @ode_kernel(%arg0: i32, %arg1: memref<1xf32, #tpu.memory_space<smem>>, %arg2: memref<8xf32, #tpu.memory_space<smem>>, %arg3: memref<8xf32, #tpu.memory_space<smem>>, %arg4: memref<8xf32, #tpu.memory_space<smem>>, %arg5: memref<8xf32, #tpu.memory_space<smem>>, %arg6: memref<6xf32, #tpu.memory_space<smem>>, %arg7: memref<2x8x128xf32, #tpu.memory_space<vmem>>, %arg8: memref<2x8x128xf32, #tpu.memory_space<vmem>>) attributes {dimension_semantics = [#tpu.dimension_semantics<arbitrary>], iteration_bounds = array<i64: 1>, scalar_prefetch = 6 : i64, scratch_operands = 0 : i64, tpu.core_type = #tpu.core_type<tc>, window_params = [{transform_indices = @transform_0, window_bounds = array<i64: 2, 8, 128>}, {transform_indices = @transform_1, window_bounds = array<i64: 2, 8, 128>}]} {
    %c0 = arith.constant 0 : index
    %0 = memref.load %arg1[%c0] : memref<1xf32, #tpu.memory_space<smem>>
    %1 = arith.fptosi %0 : f32 to i32
    %c7_i32 = arith.constant 7 : i32
    %2 = arith.minsi %1, %c7_i32 : i32
    %c0_0 = arith.constant 0 : index
    %3 = memref.load %arg6[%c0_0] : memref<6xf32, #tpu.memory_space<smem>>
    %c1 = arith.constant 1 : index
    %4 = memref.load %arg6[%c1] : memref<6xf32, #tpu.memory_space<smem>>
    %c2 = arith.constant 2 : index
    %5 = memref.load %arg6[%c2] : memref<6xf32, #tpu.memory_space<smem>>
    %c3 = arith.constant 3 : index
    %6 = memref.load %arg6[%c3] : memref<6xf32, #tpu.memory_space<smem>>
    %c4 = arith.constant 4 : index
    %7 = memref.load %arg6[%c4] : memref<6xf32, #tpu.memory_space<smem>>
    %c5 = arith.constant 5 : index
    %8 = memref.load %arg6[%c5] : memref<6xf32, #tpu.memory_space<smem>>
    %9 = arith.index_cast %2 : i32 to index
    %10 = memref.load %arg2[%9] : memref<8xf32, #tpu.memory_space<smem>>
    %11 = arith.index_cast %2 : i32 to index
    %12 = memref.load %arg3[%11] : memref<8xf32, #tpu.memory_space<smem>>
    %13 = arith.index_cast %2 : i32 to index
    %14 = memref.load %arg4[%13] : memref<8xf32, #tpu.memory_space<smem>>
    %15 = arith.index_cast %2 : i32 to index
    %16 = memref.load %arg5[%15] : memref<8xf32, #tpu.memory_space<smem>>
    %17 = arith.addf %3, %6 : f32
    %18 = arith.mulf %10, %17 : f32
    %19 = arith.mulf %12, %4 : f32
    %20 = arith.addf %18, %19 : f32
    %21 = arith.mulf %16, %7 : f32
    %22 = arith.addf %20, %21 : f32
    %cst = arith.constant 2.000000e+01 : f32
    %23 = arith.mulf %cst, %14 : f32
    %cst_1 = arith.constant 2.000000e-02 : f32
    %24 = arith.mulf %cst_1, %8 : f32
    %c0_2 = arith.constant 0 : index
    %c0_3 = arith.constant 0 : index
    %c0_4 = arith.constant 0 : index
    %25 = vector.load %arg7[%c0_2, %c0_3, %c0_4] : memref<2x8x128xf32, #tpu.memory_space<vmem>>, vector<1x8x128xf32>
    %26 = vector.shape_cast %25 : vector<1x8x128xf32> to vector<8x128xf32>
    %c1_5 = arith.constant 1 : index
    %c0_6 = arith.constant 0 : index
    %c0_7 = arith.constant 0 : index
    %27 = vector.load %arg7[%c1_5, %c0_6, %c0_7] : memref<2x8x128xf32, #tpu.memory_space<vmem>>, vector<1x8x128xf32>
    %28 = vector.shape_cast %27 : vector<1x8x128xf32> to vector<8x128xf32>
    %cst_8 = arith.constant 2.000000e+01 : f32
    %29 = vector.broadcast %cst_8 : f32 to vector<8x128xf32>
    %30 = arith.mulf %29, %26 : vector<8x128xf32>
    %31 = vector.broadcast %23 : f32 to vector<8x128xf32>
    %32 = arith.subf %31, %30 : vector<8x128xf32>
    %33 = arith.negf %32 : vector<8x128xf32>
    %34 = math.exp %33 : vector<8x128xf32>
    %cst_9 = arith.constant 1.000000e+00 : f32
    %35 = vector.broadcast %cst_9 : f32 to vector<8x128xf32>
    %36 = arith.addf %35, %34 : vector<8x128xf32>
    %37 = arith.divf %35, %36 : vector<8x128xf32>
    %38 = vector.broadcast %17 : f32 to vector<8x128xf32>
    %39 = arith.mulf %38, %26 : vector<8x128xf32>
    %40 = vector.broadcast %22 : f32 to vector<8x128xf32>
    %41 = arith.subf %40, %39 : vector<8x128xf32>
    %42 = vector.broadcast %5 : f32 to vector<8x128xf32>
    %43 = arith.mulf %42, %28 : vector<8x128xf32>
    %44 = arith.addf %41, %43 : vector<8x128xf32>
    %c0_10 = arith.constant 0 : index
    %c0_11 = arith.constant 0 : index
    %c0_12 = arith.constant 0 : index
    %45 = vector.load %arg8[%c0_10, %c0_11, %c0_12] : memref<2x8x128xf32, #tpu.memory_space<vmem>>, vector<1x8x128xf32>
    %46 = vector.shape_cast %45 : vector<1x8x128xf32> to vector<8x128xf32>
    %47 = vector.shape_cast %44 : vector<8x128xf32> to vector<1x8x128xf32>
    tpu.vector_store %arg8[%c0_10, %c0_11, %c0_12], %47 {strides = array<i32>} : memref<2x8x128xf32, #tpu.memory_space<vmem>>, vector<1x8x128xf32>,
    %48 = vector.broadcast %24 : f32 to vector<8x128xf32>
    %49 = arith.mulf %48, %37 : vector<8x128xf32>
    %cst_13 = arith.constant 2.000000e-02 : f32
    %50 = vector.broadcast %cst_13 : f32 to vector<8x128xf32>
    %51 = arith.mulf %50, %28 : vector<8x128xf32>
    %52 = arith.subf %49, %51 : vector<8x128xf32>
    %c1_14 = arith.constant 1 : index
    %c0_15 = arith.constant 0 : index
    %c0_16 = arith.constant 0 : index
    %53 = vector.load %arg8[%c1_14, %c0_15, %c0_16] : memref<2x8x128xf32, #tpu.memory_space<vmem>>, vector<1x8x128xf32>
    %54 = vector.shape_cast %53 : vector<1x8x128xf32> to vector<8x128xf32>
    %55 = vector.shape_cast %52 : vector<8x128xf32> to vector<1x8x128xf32>
    tpu.vector_store %arg8[%c1_14, %c0_15, %c0_16], %55 {strides = array<i32>} : memref<2x8x128xf32, #tpu.memory_space<vmem>>, vector<1x8x128xf32>,
    return
  }
  func.func @transform_0(%arg0: i32, %arg1: memref<1xf32, #tpu.memory_space<smem>>, %arg2: memref<8xf32, #tpu.memory_space<smem>>, %arg3: memref<8xf32, #tpu.memory_space<smem>>, %arg4: memref<8xf32, #tpu.memory_space<smem>>, %arg5: memref<8xf32, #tpu.memory_space<smem>>, %arg6: memref<6xf32, #tpu.memory_space<smem>>) -> (i32, i32, i32) {
    %c0_i32 = arith.constant 0 : i32
    %c0_i32_0 = arith.constant 0 : i32
    %c0_i32_1 = arith.constant 0 : i32
    return %c0_i32, %arg0, %c0_i32_0 : i32, i32, i32
  }
  func.func @transform_1(%arg0: i32, %arg1: memref<1xf32, #tpu.memory_space<smem>>, %arg2: memref<8xf32, #tpu.memory_space<smem>>, %arg3: memref<8xf32, #tpu.memory_space<smem>>, %arg4: memref<8xf32, #tpu.memory_space<smem>>, %arg5: memref<8xf32, #tpu.memory_space<smem>>, %arg6: memref<6xf32, #tpu.memory_space<smem>>) -> (i32, i32, i32) {
    %c0_i32 = arith.constant 0 : i32
    %c0_i32_0 = arith.constant 0 : i32
    %c0_i32_1 = arith.constant 0 : i32
    return %c0_i32, %arg0, %c0_i32_0 : i32, i32, i32
  }
}

</mosaic_0001>

<llo_original>
// kernel: tpu_custom_call.1
$region0: #{tpu_custom_call.1}
  #allocation0 [shape = 'u32[]', space=smem, size = 0x4, offset = 0x4, fixed_abs, tag = 'smem constant byte address 0x4 - core index']
  #allocation1 [shape = 'u32[144,128]{1,0:T(1,128)}', space=vmem, size = 0x12000, scoped, tag = 'internal scratch']
  #allocation2 [shape = 's32[1]{0}', space=sflag, size = 0x4, scoped, tag = 'scoped memory for tpu_custom_call.1']
  #allocation3 [shape = 'f32[1]{0:T(128)S(6)}', space=smem, size = 0x200, scoped, tag = 'prefetched SMEM operand 0']
  #allocation4 [shape = 'u8[512]{0}', space=smem, size = 0x200, scoped, tag = 'prefetched SMEM operand 1']
  #allocation5 [shape = 'u8[512]{0}', space=smem, size = 0x200, scoped, tag = 'prefetched SMEM operand 2']
  #allocation6 [shape = 'u8[512]{0}', space=smem, size = 0x200, scoped, tag = 'prefetched SMEM operand 3']
  #allocation7 [shape = 'u8[512]{0}', space=smem, size = 0x200, scoped, tag = 'prefetched SMEM operand 4']
  #allocation8 [shape = 'u8[512]{0}', space=smem, size = 0x200, scoped, tag = 'prefetched SMEM operand 5']
  %s0 = inlined_call_operand.<no memory space> [shape: f32[1], index: 0, kind: input, shape index: {}]
  %s1 = inlined_call_operand.vmem [shape: f32[8], index: 1, kind: input, shape index: {}]
  %s2 = inlined_call_operand.vmem [shape: f32[8], index: 2, kind: input, shape index: {}]
  %s3 = inlined_call_operand.vmem [shape: f32[8], index: 3, kind: input, shape index: {}]
  %s4 = inlined_call_operand.vmem [shape: f32[8], index: 4, kind: input, shape index: {}]
  %s5 = inlined_call_operand.vmem [shape: f32[6], index: 5, kind: input, shape index: {}]
  %s6 = inlined_call_operand.vmem [shape: f32[2,8,128], index: 6, kind: input, shape index: {}]
  %s7 = inlined_call_operand.hbm [shape: f32[2,8,128], index: 7, kind: output, shape index: {}]
  %s8 = sld [smem:[#allocation0]]
  $region14: #{tpu_custom_call.1} parent=0
    _
  %s10 = ssub.s32 1, %s8
  %s11 = scalar_select 0, %s10, %s8
  %12 = sst [smem:[#allocation3]] %s0
  %s13 = sshll.u32 %s1, 4
  %s14 = int_to_ptr.vmem [resolvable:$true] %s13
  %16 = dma.vmem_to_smem %s14, 16, [#allocation4], [#allocation2]
  %s17 = sshll.u32 %s2, 4
  %s18 = int_to_ptr.vmem [resolvable:$true] %s17
  %20 = dma.vmem_to_smem %s18, 16, [#allocation5], [#allocation2]
  %s21 = sshll.u32 %s3, 4
  %s22 = int_to_ptr.vmem [resolvable:$true] %s21
  %24 = dma.vmem_to_smem %s22, 16, [#allocation6], [#allocation2]
  %s25 = sshll.u32 %s4, 4
  %s26 = int_to_ptr.vmem [resolvable:$true] %s25
  %28 = dma.vmem_to_smem %s26, 16, [#allocation7], [#allocation2]
  %s29 = sshll.u32 %s5, 4
  %s30 = int_to_ptr.vmem [resolvable:$true] %s29
  %32 = dma.vmem_to_smem %s30, 16, [#allocation8], [#allocation2]
  %33 = dma.done [#allocation2], 80
  %34 = sfence
  $region1: #{tpu_custom_call.1} parent=0
    #allocation9 [shape = 'u8[8192]{0}', space=vmem, size = 0x2000, scoped, tag = 'output window, operand 0, single buffered']
    #allocation10 [shape = 's32[1]{0}', space=sflag, size = 0x4, scoped, tag = 'scoped memory for tpu_custom_call.1']
    %35 = vsyncpa [#allocation10], 0
    // Predicated region
    $region2: #{tpu_custom_call.1} parent=1 // pred_check
      _
    $region3: #{tpu_custom_call.1} parent=1 // pred_check_branch
      %37 = sbr.rel (0) target = $region5
    $region4: #{tpu_custom_call.1} parent=1 // pred_region
      _
    $region5: #{tpu_custom_call.1} parent=1 // pred_fallthru
      _
    %s38 = sld [smem:[#allocation3]]
    %s39 = scvt.f32.s32.to.zero.pseudo %s38
    %p40 = scmp.lt.s32.totalorder %s39, 7
    %s41 = scalar_select %p40, %s39, 7
    %s42 = sld [smem:[#allocation8]]
    %s43 = sld [smem:[#allocation8 + $0x1]]
    %s44 = sld [smem:[#allocation8 + $0x2]]
    %s45 = sld [smem:[#allocation8 + $0x3]]
    %s46 = sld [smem:[#allocation8 + $0x4]]
    %s47 = sld [smem:[#allocation8 + $0x5]]
    %s48 = sld [smem:[#allocation4 + %s41]]
    %s49 = sld [smem:[#allocation5 + %s41]]
    %s50 = sld [smem:[#allocation6 + %s41]]
    %s51 = sld [smem:[#allocation7 + %s41]]
    %s52 = sadd.f32 %s42, %s45
    %s53 = smul.f32 %s48, %s52
    %s54 = smul.f32 %s49, %s43
    %s55 = sadd.f32 %s53, %s54
    %s56 = smul.f32 %s51, %s46
    %s57 = sadd.f32 %s55, %s56
    %s58 = smul.f32 %s50, 20.0
    %s59 = smul.f32 %s47, 0.02
    %v60 = vld [vmem:[%s6] sm:$0xff]
    %s61 = scalar_lea.vmem %s6, 8
    %v62 = vld [vmem:[%s61] sm:$0xff]
    %v63 = vmul.f32 %v60, 20.0
    %v64 = vstv %s58
    %v65 = vsub.f32 %v64, %v63
    %v66 = vxor.u32 %v65, 2147483648
    %v67 = vmul.f32 %v66, 1.442695
    %v68 = vpow.pop %v67
    %v69 = vadd.f32 %v68, 1.0
    %v70 = vrcp.pop %v69
    %v71 = vmul.f32 1.0, %v70
    %v72 = vstv %s52
    %v73 = vmul.f32 %v72, %v60
    %v74 = vstv %s57
    %v75 = vsub.f32 %v74, %v73
    %v76 = vstv %s44
    %v77 = vmul.f32 %v76, %v62
    %v78 = vadd.f32 %v75, %v77
    %79 = vst [vmem:[#allocation9] sm:$0xff] %v78
    %v80 = vstv %s59
    %v81 = vmul.f32 %v80, %v71
    %v82 = vmul.f32 %v62, 0.02
    %v83 = vsub.f32 %v81, %v82
    %s84 = scalar_lea.vmem [#allocation9], 8
    %85 = vst [vmem:[%s84] sm:$0xff] %v83
    // Predicated region
    $region6: #{tpu_custom_call.1} parent=1 // pred_check
      _
    $region7: #{tpu_custom_call.1} parent=1 // pred_check_branch
      %87 = sbr.rel (0) target = $region9
    $region8: #{tpu_custom_call.1} parent=1 // pred_region
      %s89 = ssub.s32 256, 256
      %90 = vsyncadd [#allocation10], %s89
      %s91 = sshll.u32 [#allocation9], 4
      %s92 = int_to_ptr.vmem [resolvable:$true] %s91
      %97 = dma.vmem_to_hbm [thread:$0]  %s92, 256, %s7, [#allocation10], 128, 128, 8
    $region9: #{tpu_custom_call.1} parent=1 // pred_fallthru
      _
    // Predicated region
    $region10: #{tpu_custom_call.1} parent=1 // pred_check
      _
    $region11: #{tpu_custom_call.1} parent=1 // pred_check_branch
      %99 = sbr.rel (0) target = $region13
    $region12: #{tpu_custom_call.1} parent=1 // pred_region
      %100 = dma.done [#allocation10], 256
    $region13: #{tpu_custom_call.1} parent=1 // pred_fallthru
      _
    %101 = vsyncpa [#allocation10], 1

</llo_original>
